<compile_context>
chip_gen: v7x
topology: tpu7x:2x2x1
jax: 0.10.0
libtpu: 0.0.40
codegen_flags: <defaults>
</compile_context>

<pallas_src>
import functools

import jax
import jax.numpy as jnp
from jax.experimental import pallas as pl
from jax.experimental.pallas import tpu as pltpu


def actor_kernel(x_ref, w1_ref, b1_ref, w2_ref, b2_ref, w3_ref, b3_ref, p_ref):
    # Layer 0: bf16 matmul inputs (cast in-kernel), f32 accumulation + bias.
    x = x_ref[...].astype(jnp.bfloat16)
    h = jnp.dot(x, w1_ref[...], preferred_element_type=jnp.float32) + b1_ref[...]
    # Hidden layer: tanh (f32) then linear (bf16 inputs, f32 acc).
    h = jnp.tanh(h)
    h = jnp.dot(h.astype(jnp.bfloat16), w2_ref[...],
                preferred_element_type=jnp.float32) + b2_ref[...]
    # Output layer: un-padded out_size lanes.
    h = jnp.tanh(h)
    logits = jnp.dot(h.astype(jnp.bfloat16), w3_ref[...],
                     preferred_element_type=jnp.float32) + b3_ref[...]
    # Numerically stable softmax over the action (lane) axis.  Exact divide so
    # rows sum to 1 (downstream Categorical needs normalized probabilities).
    m = jnp.max(logits, axis=-1, keepdims=True)
    e = jnp.exp(logits - m)
    denom = jnp.sum(e, axis=-1, keepdims=True)
    p_ref[...] = (e / denom).astype(p_ref.dtype)


def _round_up(a, b):
    return -(-a // b) * b


@functools.partial(jax.jit, static_argnames=("batch_tile",))
def actor_forward(x, params, *, batch_tile=2048):
    """Returns Categorical probabilities, shape (batch, outSize), float32."""
    w1, b1, w2, b2, w3, b3 = params
    B, in_size = x.shape
    h1 = w1.shape[1]
    h2 = w2.shape[1]
    out_size = w3.shape[1]

    # Batch tile: multiple of 8 (sublane).  Per-tile compute is tiny, so big
    # tiles amortize the per-grid-step pipeline overhead; cap at ceil(B/2)
    # when B is large enough so v7x's two TensorCores each get >=1 step.
    bt = min(batch_tile, _round_up(B, 8))
    if B > 16:
        bt = min(bt, _round_up(-(-B // 2), 8))
    bt = max(bt, 8)
    grid = (pl.cdiv(B, bt),)

    # bf16 weights for the MXU (accumulation stays f32 inside the kernel);
    # biases stay f32.
    w1b = w1.astype(jnp.bfloat16)
    w2b = w2.astype(jnp.bfloat16)
    w3b = w3.astype(jnp.bfloat16)

    flops = 2 * B * (in_size * h1 + h1 * h2 + h2 * out_size)
    transcendentals = B * (h1 + h2 + out_size)  # tanh + exp
    bytes_accessed = (
        x.size * x.dtype.itemsize
        + (w1b.size + w2b.size + w3b.size) * 2
        + (b1.size + b2.size + b3.size) * 4
        + B * out_size * 4)

    probs = pl.pallas_call(
        actor_kernel,
        out_shape=jax.ShapeDtypeStruct((B, out_size), jnp.float32),
        grid=grid,
        in_specs=[
            # x streams per grid step (ragged last tile handled by Pallas).
            pl.BlockSpec((bt, in_size), lambda i: (i, 0)),
            # Parameters: constant block index -> VMEM-resident across steps.
            pl.BlockSpec((in_size, h1), lambda i: (0, 0)),
            pl.BlockSpec((1, h1), lambda i: (0, 0)),
            pl.BlockSpec((h1, h2), lambda i: (0, 0)),
            pl.BlockSpec((1, h2), lambda i: (0, 0)),
            pl.BlockSpec((h2, out_size), lambda i: (0, 0)),
            pl.BlockSpec((1, out_size), lambda i: (0, 0)),
        ],
        out_specs=pl.BlockSpec((bt, out_size), lambda i: (i, 0)),
        compiler_params=pltpu.CompilerParams(
            dimension_semantics=("parallel",),
            # bt=2048 needs <6 MiB, bt=4096 ~11 MiB; 48 MiB covers large tiles
            # on v5e (16 MiB default scoped limit) and stays under v7x's
            # 64 MiB physical VMEM.
            vmem_limit_bytes=48 * 1024 * 1024),
        cost_estimate=pl.CostEstimate(
            flops=flops,
            transcendentals=transcendentals,
            bytes_accessed=bytes_accessed),
    )(x, w1b, b1, w2b, b2, w3b, b3)

    return probs


def init_params(key, in_size, out_size, layers):
    """Deterministic init mirroring nn.Linear's U(-1/sqrt(fan_in), 1/sqrt(fan_in))."""
    sizes = [in_size] + list(layers) + [out_size]
    params = []
    for i in range(len(sizes) - 1):
        fan_in, fan_out = sizes[i], sizes[i + 1]
        key, kw, kb = jax.random.split(key, 3)
        bound = 1.0 / jnp.sqrt(jnp.float32(fan_in))
        w = jax.random.uniform(kw, (fan_in, fan_out), jnp.float32, -bound, bound)
        b = jax.random.uniform(kb, (1, fan_out), jnp.float32, -bound, bound)
        params.extend([w, b])
    return tuple(params)


def actor_reference_f32(x, params):
    w1, b1, w2, b2, w3, b3 = params
    h = x @ w1 + b1
    h = jnp.tanh(h) @ w2 + b2
    logits = jnp.tanh(h) @ w3 + b3
    return jax.nn.softmax(logits, axis=-1)


def actor_reference_bf16(x, params):
    """Reference matching the kernel's bf16-matmul / f32-accumulate path."""
    w1, b1, w2, b2, w3, b3 = params
    mm = lambda a, b: jnp.dot(a.astype(jnp.bfloat16), b.astype(jnp.bfloat16),
                              preferred_element_type=jnp.float32)
    h = mm(x, w1) + b1
    h = mm(jnp.tanh(h), w2) + b2
    logits = mm(jnp.tanh(h), w3) + b3
    return jax.nn.softmax(logits, axis=-1)


if __name__ == "__main__":
    # Shapes consistent with the module: state dim 16, 2 hidden layers of 32,
    # 8 discrete actions.
    IN_SIZE, OUT_SIZE = 16, 8
    LAYERS = [32, 32]

    key = jax.random.PRNGKey(0)
    kx, kp, kx2 = jax.random.split(key, 3)
    params = init_params(kp, IN_SIZE, OUT_SIZE, LAYERS)

    # --- small batch (single grid step) ---
    B = 8
    x = jax.random.normal(kx, (B, IN_SIZE), jnp.float32)
    probs = jax.block_until_ready(actor_forward(x, params))
    assert probs.shape == (B, OUT_SIZE)
    # Categorical probs must sum to 1 per row (exact divide in the kernel).
    assert jnp.allclose(jnp.sum(probs, axis=-1), 1.0, atol=1e-4)
    assert jnp.allclose(probs, actor_reference_bf16(x, params), atol=5e-3)
    assert jnp.allclose(probs, actor_reference_f32(x, params), atol=3e-2)

    # --- larger batch: multi-step grid (2 tiles) with a ragged last tile ---
    B2 = 600  # bt = 304 -> grid of 2 steps, second step partially filled
    x2 = jax.random.normal(kx2, (B2, IN_SIZE), jnp.float32)
    probs2 = jax.block_until_ready(actor_forward(x2, params))
    assert probs2.shape == (B2, OUT_SIZE)
    assert jnp.allclose(jnp.sum(probs2, axis=-1), 1.0, atol=1e-4)
    assert jnp.allclose(probs2, actor_reference_bf16(x2, params), atol=5e-3)
    assert jnp.allclose(probs2, actor_reference_f32(x2, params), atol=3e-2)

    print("KERNEL_OK")
</pallas_src>

<mosaic_0001>
module attributes {stable_mosaic.version = 11 : i64} {
  func.func @actor_kernel(%arg0: i32, %arg1: memref<8x16xf32, #tpu.memory_space<vmem>>, %arg2: memref<16x32xbf16, #tpu.memory_space<vmem>>, %arg3: memref<1x32xf32, #tpu.memory_space<vmem>>, %arg4: memref<32x32xbf16, #tpu.memory_space<vmem>>, %arg5: memref<1x32xf32, #tpu.memory_space<vmem>>, %arg6: memref<32x8xbf16, #tpu.memory_space<vmem>>, %arg7: memref<1x8xf32, #tpu.memory_space<vmem>>, %arg8: memref<8x8xf32, #tpu.memory_space<vmem>>) attributes {dimension_semantics = [#tpu.dimension_semantics<parallel>], iteration_bounds = array<i64: 1>, scalar_prefetch = 0 : i64, scratch_operands = 0 : i64, tpu.core_type = #tpu.core_type<tc>, window_params = [{transform_indices = @transform_0, window_bounds = array<i64: 8, 16>}, {pipeline_mode = #tpu.pipeline_mode<synchronous>, transform_indices = @transform_1, window_bounds = array<i64: 16, 32>}, {pipeline_mode = #tpu.pipeline_mode<synchronous>, transform_indices = @transform_2, window_bounds = array<i64: 1, 32>}, {pipeline_mode = #tpu.pipeline_mode<synchronous>, transform_indices = @transform_3, window_bounds = array<i64: 32, 32>}, {pipeline_mode = #tpu.pipeline_mode<synchronous>, transform_indices = @transform_4, window_bounds = array<i64: 1, 32>}, {pipeline_mode = #tpu.pipeline_mode<synchronous>, transform_indices = @transform_5, window_bounds = array<i64: 32, 8>}, {pipeline_mode = #tpu.pipeline_mode<synchronous>, transform_indices = @transform_6, window_bounds = array<i64: 1, 8>}, {transform_indices = @transform_7, window_bounds = array<i64: 8, 8>}]} {
    %c0 = arith.constant 0 : index
    %c0_0 = arith.constant 0 : index
    %0 = vector.load %arg1[%c0, %c0_0] : memref<8x16xf32, #tpu.memory_space<vmem>>, vector<8x16xf32>
    %1 = arith.truncf %0 : vector<8x16xf32> to vector<8x16xbf16>
    %c0_1 = arith.constant 0 : index
    %c0_2 = arith.constant 0 : index
    %2 = vector.load %arg2[%c0_1, %c0_2] : memref<16x32xbf16, #tpu.memory_space<vmem>>, vector<16x32xbf16>
    %cst = arith.constant dense<0.000000e+00> : vector<8x32xf32>
    %3 = tpu.matmul %1, %2, %cst {dimension_numbers = #tpu.dot_dimension_numbers<[1], [0], [0], [1], [0, 0, 1, 1], [], []>} : vector<8x16xbf16>, vector<16x32xbf16>, vector<8x32xf32> -> vector<8x32xf32>
    %c0_3 = arith.constant 0 : index
    %c0_4 = arith.constant 0 : index
    %4 = vector.load %arg3[%c0_3, %c0_4] : memref<1x32xf32, #tpu.memory_space<vmem>>, vector<1x32xf32>
    %5 = vector.broadcast %4 : vector<1x32xf32> to vector<8x32xf32>
    %6 = arith.addf %3, %5 : vector<8x32xf32>
    %7 = math.tanh %6 : vector<8x32xf32>
    %8 = arith.truncf %7 : vector<8x32xf32> to vector<8x32xbf16>
    %c0_5 = arith.constant 0 : index
    %c0_6 = arith.constant 0 : index
    %9 = vector.load %arg4[%c0_5, %c0_6] : memref<32x32xbf16, #tpu.memory_space<vmem>>, vector<32x32xbf16>
    %cst_7 = arith.constant dense<0.000000e+00> : vector<8x32xf32>
    %10 = tpu.matmul %8, %9, %cst_7 {dimension_numbers = #tpu.dot_dimension_numbers<[1], [0], [0], [1], [0, 0, 1, 1], [], []>} : vector<8x32xbf16>, vector<32x32xbf16>, vector<8x32xf32> -> vector<8x32xf32>
    %c0_8 = arith.constant 0 : index
    %c0_9 = arith.constant 0 : index
    %11 = vector.load %arg5[%c0_8, %c0_9] : memref<1x32xf32, #tpu.memory_space<vmem>>, vector<1x32xf32>
    %12 = vector.broadcast %11 : vector<1x32xf32> to vector<8x32xf32>
    %13 = arith.addf %10, %12 : vector<8x32xf32>
    %14 = math.tanh %13 : vector<8x32xf32>
    %15 = arith.truncf %14 : vector<8x32xf32> to vector<8x32xbf16>
    %c0_10 = arith.constant 0 : index
    %c0_11 = arith.constant 0 : index
    %16 = vector.load %arg6[%c0_10, %c0_11] : memref<32x8xbf16, #tpu.memory_space<vmem>>, vector<32x8xbf16>
    %cst_12 = arith.constant dense<0.000000e+00> : vector<8x8xf32>
    %17 = tpu.matmul %15, %16, %cst_12 {dimension_numbers = #tpu.dot_dimension_numbers<[1], [0], [0], [1], [0, 0, 1, 1], [], []>} : vector<8x32xbf16>, vector<32x8xbf16>, vector<8x8xf32> -> vector<8x8xf32>
    %c0_13 = arith.constant 0 : index
    %c0_14 = arith.constant 0 : index
    %18 = vector.load %arg7[%c0_13, %c0_14] : memref<1x8xf32, #tpu.memory_space<vmem>>, vector<1x8xf32>
    %19 = vector.broadcast %18 : vector<1x8xf32> to vector<8x8xf32>
    %20 = arith.addf %17, %19 : vector<8x8xf32>
    %cst_15 = arith.constant dense<0xFF800000> : vector<8xf32>
    %21 = vector.multi_reduction <maximumf>, %20, %cst_15 [1] : vector<8x8xf32> to vector<8xf32>
    %22 = vector.shape_cast %21 : vector<8xf32> to vector<8x1xf32>
    %23 = vector.broadcast %22 : vector<8x1xf32> to vector<8x8xf32>
    %24 = arith.subf %20, %23 : vector<8x8xf32>
    %25 = math.exp %24 : vector<8x8xf32>
    %cst_16 = arith.constant dense<0.000000e+00> : vector<8xf32>
    %26 = vector.multi_reduction <add>, %25, %cst_16 [1] : vector<8x8xf32> to vector<8xf32>
    %27 = vector.shape_cast %26 : vector<8xf32> to vector<8x1xf32>
    %28 = vector.broadcast %27 : vector<8x1xf32> to vector<8x8xf32>
    %29 = arith.divf %25, %28 : vector<8x8xf32>
    %c0_17 = arith.constant 0 : index
    %c0_18 = arith.constant 0 : index
    %30 = vector.load %arg8[%c0_17, %c0_18] : memref<8x8xf32, #tpu.memory_space<vmem>>, vector<8x8xf32>
    tpu.vector_store %arg8[%c0_17, %c0_18], %29 {strides = array<i32>} : memref<8x8xf32, #tpu.memory_space<vmem>>, vector<8x8xf32>,
    return
  }
  func.func @transform_0(%arg0: i32) -> (i32, i32) {
    %c0_i32 = arith.constant 0 : i32
    %c0_i32_0 = arith.constant 0 : i32
    return %arg0, %c0_i32 : i32, i32
  }
  func.func @transform_1(%arg0: i32) -> (i32, i32) {
    %c0_i32 = arith.constant 0 : i32
    %c0_i32_0 = arith.constant 0 : i32
    %c0_i32_1 = arith.constant 0 : i32
    return %c0_i32, %c0_i32_0 : i32, i32
  }
  func.func @transform_2(%arg0: i32) -> (i32, i32) {
    %c0_i32 = arith.constant 0 : i32
    %c0_i32_0 = arith.constant 0 : i32
    %c0_i32_1 = arith.constant 0 : i32
    return %c0_i32, %c0_i32_0 : i32, i32
  }
  func.func @transform_3(%arg0: i32) -> (i32, i32) {
    %c0_i32 = arith.constant 0 : i32
    %c0_i32_0 = arith.constant 0 : i32
    %c0_i32_1 = arith.constant 0 : i32
    return %c0_i32, %c0_i32_0 : i32, i32
  }
  func.func @transform_4(%arg0: i32) -> (i32, i32) {
    %c0_i32 = arith.constant 0 : i32
    %c0_i32_0 = arith.constant 0 : i32
    %c0_i32_1 = arith.constant 0 : i32
    return %c0_i32, %c0_i32_0 : i32, i32
  }
  func.func @transform_5(%arg0: i32) -> (i32, i32) {
    %c0_i32 = arith.constant 0 : i32
    %c0_i32_0 = arith.constant 0 : i32
    %c0_i32_1 = arith.constant 0 : i32
    return %c0_i32, %c0_i32_0 : i32, i32
  }
  func.func @transform_6(%arg0: i32) -> (i32, i32) {
    %c0_i32 = arith.constant 0 : i32
    %c0_i32_0 = arith.constant 0 : i32
    %c0_i32_1 = arith.constant 0 : i32
    return %c0_i32, %c0_i32_0 : i32, i32
  }
  func.func @transform_7(%arg0: i32) -> (i32, i32) {
    %c0_i32 = arith.constant 0 : i32
    %c0_i32_0 = arith.constant 0 : i32
    return %arg0, %c0_i32 : i32, i32
  }
}

</mosaic_0001>

<llo_original>
// kernel: actor_forward.1
$region0: #{actor_forward.1}
  #allocation0 [shape = 'u32[]', space=smem, size = 0x4, offset = 0x4, fixed_abs, tag = 'smem constant byte address 0x4 - core index']
  #allocation1 [shape = 'u32[144,128]{1,0:T(1,128)}', space=vmem, size = 0x12000, scoped, tag = 'internal scratch']
  %s0 = inlined_call_operand.vmem [shape: f32[8,16], index: 0, kind: input, shape index: {}]
  %s1 = inlined_call_operand.vmem [shape: bf16[16,32], index: 1, kind: input, shape index: {}]
  %s2 = inlined_call_operand.vmem [shape: f32[1,32], index: 2, kind: input, shape index: {}]
  %s3 = inlined_call_operand.vmem [shape: bf16[32,32], index: 3, kind: input, shape index: {}]
  %s4 = inlined_call_operand.vmem [shape: f32[1,32], index: 4, kind: input, shape index: {}]
  %s5 = inlined_call_operand.vmem [shape: bf16[32,8], index: 5, kind: input, shape index: {}]
  %s6 = inlined_call_operand.vmem [shape: f32[1,8], index: 6, kind: input, shape index: {}]
  %s7 = inlined_call_operand.hbm [shape: f32[8,8], index: 7, kind: output, shape index: {}]
  %s8 = sld [smem:[#allocation0]]
  $region38: #{actor_forward.1} parent=0
    _
  %s10 = ssub.s32 1, %s8
  %s11 = scalar_select 0, %s10, %s8
  $region1: #{actor_forward.1} parent=0
    #allocation2 [shape = 'u8[4096]{0}', space=vmem, size = 0x1000, scoped, tag = 'output window, operand 0, single buffered']
    #allocation3 [shape = 's32[1]{0}', space=sflag, size = 0x4, scoped, tag = 'scoped memory for actor_forward.1']
    %12 = vsyncpa [#allocation3], 0
    // Predicated region
    $region2: #{actor_forward.1} parent=1 // pred_check
      _
    $region3: #{actor_forward.1} parent=1 // pred_check_branch
      %14 = sbr.rel (0) target = $region5
    $region4: #{actor_forward.1} parent=1 // pred_region
      _
    $region5: #{actor_forward.1} parent=1 // pred_fallthru
      _
    // Predicated region
    $region6: #{actor_forward.1} parent=1 // pred_check
      _
    $region7: #{actor_forward.1} parent=1 // pred_check_branch
      %16 = sbr.rel (0) target = $region9
    $region8: #{actor_forward.1} parent=1 // pred_region
      _
    $region9: #{actor_forward.1} parent=1 // pred_fallthru
      _
    // Predicated region
    $region10: #{actor_forward.1} parent=1 // pred_check
      _
    $region11: #{actor_forward.1} parent=1 // pred_check_branch
      %18 = sbr.rel (0) target = $region13
    $region12: #{actor_forward.1} parent=1 // pred_region
      _
    $region13: #{actor_forward.1} parent=1 // pred_fallthru
      _
    // Predicated region
    $region14: #{actor_forward.1} parent=1 // pred_check
      _
    $region15: #{actor_forward.1} parent=1 // pred_check_branch
      %20 = sbr.rel (0) target = $region17
    $region16: #{actor_forward.1} parent=1 // pred_region
      _
    $region17: #{actor_forward.1} parent=1 // pred_fallthru
      _
    // Predicated region
    $region18: #{actor_forward.1} parent=1 // pred_check
      _
    $region19: #{actor_forward.1} parent=1 // pred_check_branch
      %22 = sbr.rel (0) target = $region21
    $region20: #{actor_forward.1} parent=1 // pred_region
      _
    $region21: #{actor_forward.1} parent=1 // pred_fallthru
      _
    // Predicated region
    $region22: #{actor_forward.1} parent=1 // pred_check
      _
    $region23: #{actor_forward.1} parent=1 // pred_check_branch
      %24 = sbr.rel (0) target = $region25
    $region24: #{actor_forward.1} parent=1 // pred_region
      _
    $region25: #{actor_forward.1} parent=1 // pred_fallthru
      _
    // Predicated region
    $region26: #{actor_forward.1} parent=1 // pred_check
      _
    $region27: #{actor_forward.1} parent=1 // pred_check_branch
      %26 = sbr.rel (0) target = $region29
    $region28: #{actor_forward.1} parent=1 // pred_region
      _
    $region29: #{actor_forward.1} parent=1 // pred_fallthru
      _
    %v28 = vld [vmem:[%s0] sm:$0xff]
    %v29 = vpack.c.bf16 %v28, %v28
    %v30 = vld [vmem:[%s1] sm:$0xf]
    %v31 = vld [vmem:[%s1 + $0x4] sm:$0xf]
    %v32 = vld [vmem:[%s2] sm:$0x1]
    %v34 = vlaneseq
    %v35 = vshrl.u32 %v34, 7
    %v36 = vsub.s32 0, %v35
    %v37 = vrot.slane %v32, %v36
    %v41 = vunpack.c.l.b16 %v30
    %v42 = vunpack.c.l.b16 %v31
    %v43 = vpack.c.b16 %v42, %v41
    %vm45 = vcmask 130048
    %v47 = vsel %vm45, %v29, 0
    %49 = vmatprep.subr.bf16.mxu0 0
    %50 = vmatpush1.bf16.msra.mxu0 %v43
    %51 = vmatprep.subr.bf16.mxu0 0
    %52 = vmatpush1.bf16.msra.mxu0 0
    %53 = vmatprep.subr.bf16.mxu0 0
    %54 = vmatpush1.bf16.msra.mxu0 0
    %55 = vmatprep.subr.bf16.mxu0 0
    %56 = vmatpush1.bf16.msra.mxu0 0
    %57 = vmatprep.subr.bf16.mxu0 0
    %58 = vmatpush1.bf16.msra.mxu0 0
    %59 = vmatprep.subr.bf16.mxu0 0
    %60 = vmatpush1.bf16.msra.mxu0 0
    %61 = vmatprep.subr.bf16.mxu0 0
    %62 = vmatpush1.bf16.msra.mxu0 0
    %63 = vmatprep.subr.bf16.mxu0 0
    %64 = vmatpush1.bf16.msra.mxu0 0
    %65 = vmatprep.subr.bf16.mxu0 0
    %66 = vmatpush1.bf16.msra.mxu0 0
    %67 = vmatprep.subr.bf16.mxu0 0
    %68 = vmatpush1.bf16.msra.mxu0 0
    %69 = vmatprep.subr.bf16.mxu0 0
    %70 = vmatpush1.bf16.msra.mxu0 0
    %71 = vmatprep.subr.bf16.mxu0 0
    %72 = vmatpush1.bf16.msra.mxu0 0
    %73 = vmatprep.subr.bf16.mxu0 0
    %74 = vmatpush1.bf16.msra.mxu0 0
    %75 = vmatprep.subr.bf16.mxu0 0
    %76 = vmatpush1.bf16.msra.mxu0 0
    %77 = vmatprep.subr.bf16.mxu0 0
    %78 = vmatpush1.bf16.msra.mxu0 0
    %79 = vmatprep.subr.bf16.mxu0 0
    %80 = vmatpush1.bf16.msra.mxu0 0
    %81 = vmatprep.mubr.bf16.mxu0 0
    %82 = vmatmul.mubr.bf16.gmra.mrb[0].mxu0 %v47
    %v83 = vpop.f32.mrb[0].mxu0
    %v84 = vadd.f32 %v37, %v83
    %v85 = vpop.f32.mrb[0].mxu0
    %v86 = vpop.f32.mrb[0].mxu0
    %v87 = vpop.f32.mrb[0].mxu0
    %88 = vdwg.mxu0
    %v89 = vtanh.pop %v84
    %v90 = vpack.c.bf16 %v89, %v89
    %v91 = vld [vmem:[%s3] sm:$0xf]
    %v92 = vld [vmem:[%s3 + $0x4] sm:$0xf]
    %v93 = vld [vmem:[%s3 + $0x8] sm:$0xf]
    %v94 = vld [vmem:[%s3 + $0xc] sm:$0xf]
    %v95 = vld [vmem:[%s4] sm:$0x1]
    %v97 = vlaneseq
    %v98 = vshrl.u32 %v97, 7
    %v99 = vsub.s32 0, %v98
    %v100 = vrot.slane %v95, %v99
    %v106 = vunpack.c.l.b16 %v91
    %v107 = vunpack.c.l.b16 %v92
    %v108 = vunpack.c.l.b16 %v93
    %v109 = vunpack.c.l.b16 %v94
    %v110 = vpack.c.b16 %v107, %v106
    %v111 = vpack.c.b16 %v109, %v108
    %vm114 = vcmask 261120
    %v116 = vsel %vm114, %v90, 0
    %118 = vmatprep.subr.bf16.mxu0 0
    %119 = vmatpush1.bf16.msra.mxu0 %v110
    %120 = vmatprep.subr.bf16.mxu0 0
    %121 = vmatpush1.bf16.msra.mxu0 %v111
    %122 = vmatprep.subr.bf16.mxu0 0
    %123 = vmatpush1.bf16.msra.mxu0 0
    %124 = vmatprep.subr.bf16.mxu0 0
    %125 = vmatpush1.bf16.msra.mxu0 0
    %126 = vmatprep.subr.bf16.mxu0 0
    %127 = vmatpush1.bf16.msra.mxu0 0
    %128 = vmatprep.subr.bf16.mxu0 0
    %129 = vmatpush1.bf16.msra.mxu0 0
    %130 = vmatprep.subr.bf16.mxu0 0
    %131 = vmatpush1.bf16.msra.mxu0 0
    %132 = vmatprep.subr.bf16.mxu0 0
    %133 = vmatpush1.bf16.msra.mxu0 0
    %134 = vmatprep.subr.bf16.mxu0 0
    %135 = vmatpush1.bf16.msra.mxu0 0
    %136 = vmatprep.subr.bf16.mxu0 0
    %137 = vmatpush1.bf16.msra.mxu0 0
    %138 = vmatprep.subr.bf16.mxu0 0
    %139 = vmatpush1.bf16.msra.mxu0 0
    %140 = vmatprep.subr.bf16.mxu0 0
    %141 = vmatpush1.bf16.msra.mxu0 0
    %142 = vmatprep.subr.bf16.mxu0 0
    %143 = vmatpush1.bf16.msra.mxu0 0
    %144 = vmatprep.subr.bf16.mxu0 0
    %145 = vmatpush1.bf16.msra.mxu0 0
    %146 = vmatprep.subr.bf16.mxu0 0
    %147 = vmatpush1.bf16.msra.mxu0 0
    %148 = vmatprep.subr.bf16.mxu0 0
    %149 = vmatpush1.bf16.msra.mxu0 0
    %150 = vmatprep.mubr.bf16.mxu0 0
    %151 = vmatmul.mubr.bf16.gmra.mrb[0].mxu0 %v116
    %v152 = vpop.f32.mrb[0].mxu0
    %v153 = vadd.f32 %v100, %v152
    %v154 = vpop.f32.mrb[0].mxu0
    %v155 = vpop.f32.mrb[0].mxu0
    %v156 = vpop.f32.mrb[0].mxu0
    %157 = vdwg.mxu0
    %v158 = vtanh.pop %v153
    %v159 = vpack.c.bf16 %v158, %v158
    %v160 = vld [vmem:[%s5] sm:$0xf]
    %v161 = vld [vmem:[%s5 + $0x4] sm:$0xf]
    %v162 = vld [vmem:[%s5 + $0x8] sm:$0xf]
    %v163 = vld [vmem:[%s5 + $0xc] sm:$0xf]
    %v164 = vld [vmem:[%s6] sm:$0x1]
    %v166 = vlaneseq
    %v167 = vshrl.u32 %v166, 7
    %v168 = vsub.s32 0, %v167
    %v169 = vrot.slane %v164, %v168
    %v175 = vunpack.c.l.b16 %v160
    %v176 = vunpack.c.l.b16 %v161
    %v177 = vunpack.c.l.b16 %v162
    %v178 = vunpack.c.l.b16 %v163
    %v179 = vpack.c.b16 %v176, %v175
    %v180 = vpack.c.b16 %v178, %v177
    %v184 = vsel %vm114, %v159, 0
    %186 = vmatprep.subr.bf16.mxu0 0
    %187 = vmatpush1.bf16.msra.mxu0 %v179
    %188 = vmatprep.subr.bf16.mxu0 0
    %189 = vmatpush1.bf16.msra.mxu0 %v180
    %190 = vmatprep.subr.bf16.mxu0 0
    %191 = vmatpush1.bf16.msra.mxu0 0
    %192 = vmatprep.subr.bf16.mxu0 0
    %193 = vmatpush1.bf16.msra.mxu0 0
    %194 = vmatprep.subr.bf16.mxu0 0
    %195 = vmatpush1.bf16.msra.mxu0 0
    %196 = vmatprep.subr.bf16.mxu0 0
    %197 = vmatpush1.bf16.msra.mxu0 0
    %198 = vmatprep.subr.bf16.mxu0 0
    %199 = vmatpush1.bf16.msra.mxu0 0
    %200 = vmatprep.subr.bf16.mxu0 0
    %201 = vmatpush1.bf16.msra.mxu0 0
    %202 = vmatprep.subr.bf16.mxu0 0
    %203 = vmatpush1.bf16.msra.mxu0 0
    %204 = vmatprep.subr.bf16.mxu0 0
    %205 = vmatpush1.bf16.msra.mxu0 0
    %206 = vmatprep.subr.bf16.mxu0 0
    %207 = vmatpush1.bf16.msra.mxu0 0
    %208 = vmatprep.subr.bf16.mxu0 0
    %209 = vmatpush1.bf16.msra.mxu0 0
    %210 = vmatprep.subr.bf16.mxu0 0
    %211 = vmatpush1.bf16.msra.mxu0 0
    %212 = vmatprep.subr.bf16.mxu0 0
    %213 = vmatpush1.bf16.msra.mxu0 0
    %214 = vmatprep.subr.bf16.mxu0 0
    %215 = vmatpush1.bf16.msra.mxu0 0
    %216 = vmatprep.subr.bf16.mxu0 0
    %217 = vmatpush1.bf16.msra.mxu0 0
    %218 = vmatprep.mubr.bf16.mxu0 0
    %219 = vmatmul.mubr.bf16.gmra.mrb[0].mxu0 %v184
    %v220 = vpop.f32.mrb[0].mxu0
    %v221 = vadd.f32 %v169, %v220
    %v222 = vpop.f32.mrb[0].mxu0
    %v223 = vpop.f32.mrb[0].mxu0
    %v224 = vpop.f32.mrb[0].mxu0
    %225 = vdwg.mxu0
    %vm226 = vcmask 64512
    %v227 = vsel %vm226, %v221, -inf
    %228 = vmax.xlane.f32.xlu0 %v227
    %v229 = vpop.xlane.xlu0 %228
    %v230 = vsub.f32 %v221, %v229
    %v231 = vmul.f32 %v230, 1.442695
    %v232 = vpow.pop %v231
    %v233 = vsel %vm226, %v232, 0.0
    %234 = vadd.xlane.f32.xlu0 %v233
    %v235 = vpop.xlane.xlu0 %234
    %v236 = vrcp.pop %v235
    %v237 = vmul.f32 %v232, %v236
    %238 = vst.msk [vmem:[#allocation2] sm:$0xff] %vm226, %v237
    // Predicated region
    $region30: #{actor_forward.1} parent=1 // pred_check
      _
    $region31: #{actor_forward.1} parent=1 // pred_check_branch
      %240 = sbr.rel (0) target = $region33
    $region32: #{actor_forward.1} parent=1 // pred_region
      %s242 = ssub.s32 128, 128
      %243 = vsyncadd [#allocation3], %s242
      %s245 = sshll.u32 [#allocation2], 4
      %s246 = int_to_ptr.vmem [resolvable:$true] %s245
      %248 = dma.vmem_to_hbm [thread:$0]  %s246, 128, %s7, [#allocation3]
    $region33: #{actor_forward.1} parent=1 // pred_fallthru
      _
    // Predicated region
    $region34: #{actor_forward.1} parent=1 // pred_check
      _
    $region35: #{actor_forward.1} parent=1 // pred_check_branch
      %250 = sbr.rel (0) target = $region37
    $region36: #{actor_forward.1} parent=1 // pred_region
      %251 = dma.done [#allocation3], 128
    $region37: #{actor_forward.1} parent=1 // pred_fallthru
      _
    %252 = vsyncpa [#allocation3], 1

</llo_original>
